<compile_context>
chip_gen: v7x
topology: tpu7x:2x2x1
jax: 0.10.0
libtpu: 0.0.40
codegen_flags: <defaults>
</compile_context>

<pallas_src>
import functools
import math

import jax
import jax.numpy as jnp
from jax.experimental import pallas as pl
from jax.experimental.pallas import tpu as pltpu

_SMALL_FULL_BLOCK_BYTES = 2 * 1024 * 1024  # whole-array single-block cutoff


def _round_up(a, b):
    return (a + b - 1) // b * b


def _gen_block_bytes_and_vmem_limit():
    """Generation-aware target block size (bytes) and optional VMEM limit."""
    try:
        kind = jax.devices()[0].device_kind.lower()
    except Exception:
        kind = ""
    if "v7" in kind or "7x" in kind:
        return 6 * 1024 * 1024, 48 << 20   # v7x: 64 MiB physical VMEM
    if "v6" in kind:
        return 4 * 1024 * 1024, None       # v6e: 32 MiB scoped default
    return 2 * 1024 * 1024, None           # v5e / unknown: 16 MiB scoped


def _choose_block_rows(rows, target_rows, sub):
    """Pick block rows: prefer exact divisors (no partial blocks) and even
    grid-step counts (v7x megacore balance)."""
    if rows <= target_rows:
        # One block fits; split into 2 clean steps for megacore when possible.
        if rows >= 2 * sub and rows % (2 * sub) == 0:
            return rows // 2
        return rows  # full-extent block (always legal)
    cap = max(sub, (target_rows // sub) * sub)
    # Largest sub-aligned exact divisor of rows that is <= cap.
    best = None
    d = cap
    while d >= sub:
        if rows % d == 0:
            best = d
            break
        d -= sub
    if best is not None:
        steps = rows // best
        if steps % 2 == 1 and steps > 1:
            # Try a divisor giving an even step count without shrinking >2x.
            d = best - sub
            while d >= sub:
                if rows % d == 0 and (rows // d) % 2 == 0:
                    if d * 2 >= best:
                        best = d
                    break
                d -= sub
        return best
    # No exact divisor: last block is partial (Pallas masks OOB writes).
    br = cap
    steps = pl.cdiv(rows, br)
    if steps % 2 == 1 and steps > 1:
        br2 = max(sub, _round_up(pl.cdiv(rows, steps + 1), sub))
        if pl.cdiv(rows, br2) % 2 == 0:
            br = br2
    return br


def _beta_mish_kernel(x_ref, o_ref, *, beta):
    x = x_ref[...].astype(jnp.float32)
    two_beta = 2.0 * float(beta)
    k = int(round(two_beta))

    if abs(two_beta - k) < 1e-12 and 1 <= k <= 8:
        # tanh(beta*softplus(x)) = ((1+e)^k - 1) / ((1+e)^k + 1),  e = e^x.
        # Expand (1+e)^k - 1 = e * sum_{j=1..k} C(k,j) e^(j-1) (Horner) so the
        # ratio has no cancellation for negative x.
        e = jnp.exp(x)
        coeffs = [float(math.comb(k, j)) for j in range(1, k + 1)]
        poly = jnp.full_like(e, coeffs[-1])
        for c in reversed(coeffs[:-1]):
            poly = poly * e + c
        p_m1 = e * poly                                   # (1+e)^k - 1 >= 0
        t = p_m1 * pl.reciprocal(p_m1 + 2.0, approx=False)
        y = x * t
        # For large x, e^(k*x) overflows f32; tanh is fully saturated long
        # before that (beta*x = 40 at x = 80/k), so just return x there.
        thresh = 80.0 / k
        y = jnp.where(x > thresh, x, y)
    else:
        # General beta: stable softplus; tanh(z) = (1 - e^{-2z}) / (1 + e^{-2z}).
        sp = jnp.maximum(x, 0.0) + jnp.log1p(jnp.exp(-jnp.abs(x)))
        u = jnp.exp(-two_beta * sp)                       # in (0, 1]
        t = (1.0 - u) * pl.reciprocal(1.0 + u, approx=False)
        y = x * t

    o_ref[...] = y.astype(o_ref.dtype)


def _run_slab(x2d, kernel, block_bytes, vmem_limit, sub):
    rows, lanes = x2d.shape
    itemsize = jnp.dtype(x2d.dtype).itemsize
    target_rows = max(sub, (block_bytes // (lanes * itemsize)) // sub * sub)
    br = _choose_block_rows(rows, target_rows, sub)
    grid = (pl.cdiv(rows, br),)
    cp_kwargs = dict(dimension_semantics=("parallel",))
    if vmem_limit is not None:
        cp_kwargs["vmem_limit_bytes"] = int(vmem_limit)
    return pl.pallas_call(
        kernel,
        out_shape=jax.ShapeDtypeStruct((rows, lanes), x2d.dtype),
        grid_spec=pltpu.PrefetchScalarGridSpec(
            num_scalar_prefetch=0,
            grid=grid,
            in_specs=[pl.BlockSpec((br, lanes), lambda i: (i, 0))],
            out_specs=pl.BlockSpec((br, lanes), lambda i: (i, 0)),
        ),
        compiler_params=pltpu.CompilerParams(**cp_kwargs),
    )(x2d)


def beta_mish(x, beta=1.5):
    """Elementwise beta-mish via a Pallas TPU kernel. Any shape, float dtype."""
    orig_shape = x.shape
    dtype = x.dtype
    n = int(x.size)
    if n == 0:
        return x
    itemsize = jnp.dtype(dtype).itemsize
    sub = {4: 8, 2: 16, 1: 32}.get(itemsize, 8)

    block_bytes, vmem_limit = _gen_block_bytes_and_vmem_limit()
    if itemsize < 4:
        block_bytes //= 2  # headroom for the f32 intermediates in the kernel

    kernel = functools.partial(_beta_mish_kernel, beta=float(beta))

    # Path A: numel % 128 == 0 -> zero-copy lane-dense slab (common case).
    lanes = next((c for c in (1024, 512, 256, 128) if n % c == 0), None)
    if lanes is not None:
        rows = n // lanes
        out2d = _run_slab(x.reshape(rows, lanes), kernel, block_bytes,
                          vmem_limit, sub)
        return out2d.reshape(orig_shape)

    # Path B: small awkward size -> single whole-array block, still copy-free.
    if n * itemsize <= _SMALL_FULL_BLOCK_BYTES:
        out = pl.pallas_call(
            kernel,
            out_shape=jax.ShapeDtypeStruct((1, n), dtype),
        )(x.reshape(1, n))
        return out.reshape(orig_shape)

    # Path C (rare): large and not a multiple of 128 -> pad to a 1024-wide slab.
    # TODO(synk): could be made copy-free with masked edge blocks if it matters.
    lanes = 1024
    rows = pl.cdiv(n, lanes)
    n_p = rows * lanes
    x_flat = jnp.pad(jnp.ravel(x), (0, n_p - n))  # beta_mish(0) == 0 -> safe
    out2d = _run_slab(x_flat.reshape(rows, lanes), kernel, block_bytes,
                      vmem_limit, sub)
    return out2d.reshape(-1)[:n].reshape(orig_shape)


if __name__ == "__main__":
    key = jax.random.PRNGKey(0)
    x = jax.random.normal(key, (2, 4, 16, 16), dtype=jnp.float32)

    # default beta = 1.5 (fast path: integer 2*beta), lane-dense 1024 slab
    beta = 1.5
    y = jax.block_until_ready(beta_mish(x, beta=beta))
    ref = x * jnp.tanh(beta * jnp.log1p(jnp.exp(x)))
    assert y.shape == x.shape and y.dtype == x.dtype
    assert jnp.max(jnp.abs(y - ref)) < 1e-5

    # non-integer 2*beta exercises the general (stable softplus) path
    beta2 = 0.7
    y2 = jax.block_until_ready(beta_mish(x, beta=beta2))
    ref2 = x * jnp.tanh(beta2 * jnp.log1p(jnp.exp(x)))
    assert jnp.max(jnp.abs(y2 - ref2)) < 1e-5

    # numel multiple of 128 but not 1024 -> 128-lane slab, no pad/slice passes
    x3 = jax.random.normal(jax.random.PRNGKey(1), (3, 5, 128), dtype=jnp.float32)
    y3 = jax.block_until_ready(beta_mish(x3))
    ref3 = x3 * jnp.tanh(1.5 * jnp.log1p(jnp.exp(x3)))
    assert jnp.max(jnp.abs(y3 - ref3)) < 1e-5

    # small odd-sized input -> single whole-array block path
    x4 = jax.random.normal(jax.random.PRNGKey(2), (7, 13), dtype=jnp.float32)
    y4 = jax.block_until_ready(beta_mish(x4))
    ref4 = x4 * jnp.tanh(1.5 * jnp.log1p(jnp.exp(x4)))
    assert jnp.max(jnp.abs(y4 - ref4)) < 1e-5

    print("KERNEL_OK")
</pallas_src>

<mosaic_0001>
module attributes {stable_mosaic.version = 11 : i64} {
  func.func @_beta_mish_kernel(%arg0: i32, %arg1: memref<2x1024xf32, #tpu.memory_space<vmem>>, %arg2: memref<2x1024xf32, #tpu.memory_space<vmem>>) attributes {dimension_semantics = [#tpu.dimension_semantics<parallel>], iteration_bounds = array<i64: 1>, scalar_prefetch = 0 : i64, scratch_operands = 0 : i64, tpu.core_type = #tpu.core_type<tc>, window_params = [{transform_indices = @transform_0, window_bounds = array<i64: 2, 1024>}, {transform_indices = @transform_1, window_bounds = array<i64: 2, 1024>}]} {
    %c0 = arith.constant 0 : index
    %c0_0 = arith.constant 0 : index
    %0 = vector.load %arg1[%c0, %c0_0] : memref<2x1024xf32, #tpu.memory_space<vmem>>, vector<2x1024xf32>
    %1 = math.exp %0 : vector<2x1024xf32>
    %cst = arith.constant 1.000000e+00 : f32
    %2 = vector.broadcast %cst : f32 to vector<2x1024xf32>
    %3 = arith.mulf %2, %1 : vector<2x1024xf32>
    %cst_1 = arith.constant 3.000000e+00 : f32
    %4 = vector.broadcast %cst_1 : f32 to vector<2x1024xf32>
    %5 = arith.addf %3, %4 : vector<2x1024xf32>
    %6 = arith.mulf %5, %1 : vector<2x1024xf32>
    %cst_2 = arith.constant 3.000000e+00 : f32
    %7 = vector.broadcast %cst_2 : f32 to vector<2x1024xf32>
    %8 = arith.addf %6, %7 : vector<2x1024xf32>
    %9 = arith.mulf %1, %8 : vector<2x1024xf32>
    %cst_3 = arith.constant 2.000000e+00 : f32
    %10 = vector.broadcast %cst_3 : f32 to vector<2x1024xf32>
    %11 = arith.addf %9, %10 : vector<2x1024xf32>
    %12 = tpu.reciprocal %11 : vector<2x1024xf32> -> vector<2x1024xf32>
    %13 = arith.mulf %9, %12 : vector<2x1024xf32>
    %14 = arith.mulf %0, %13 : vector<2x1024xf32>
    %cst_4 = arith.constant 26.666666 : f32
    %15 = vector.broadcast %cst_4 : f32 to vector<2x1024xf32>
    %16 = arith.cmpf ogt, %0, %15 : vector<2x1024xf32>
    %17 = arith.select %16, %0, %14 : vector<2x1024xi1>, vector<2x1024xf32>
    %c0_5 = arith.constant 0 : index
    %c0_6 = arith.constant 0 : index
    %18 = vector.load %arg2[%c0_5, %c0_6] : memref<2x1024xf32, #tpu.memory_space<vmem>>, vector<2x1024xf32>
    tpu.vector_store %arg2[%c0_5, %c0_6], %17 {strides = array<i32>} : memref<2x1024xf32, #tpu.memory_space<vmem>>, vector<2x1024xf32>,
    return
  }
  func.func @transform_0(%arg0: i32) -> (i32, i32) {
    %c0_i32 = arith.constant 0 : i32
    %c0_i32_0 = arith.constant 0 : i32
    return %arg0, %c0_i32 : i32, i32
  }
  func.func @transform_1(%arg0: i32) -> (i32, i32) {
    %c0_i32 = arith.constant 0 : i32
    %c0_i32_0 = arith.constant 0 : i32
    return %arg0, %c0_i32 : i32, i32
  }
}

</mosaic_0001>

<llo_original>
// kernel: tpu_custom_call.1
$region0: #{tpu_custom_call.1}
  #allocation0 [shape = 'u32[]', space=smem, size = 0x4, offset = 0x4, fixed_abs, tag = 'smem constant byte address 0x4 - core index']
  #allocation1 [shape = 'u32[144,128]{1,0:T(1,128)}', space=vmem, size = 0x12000, scoped, tag = 'internal scratch']
  %s0 = inlined_call_operand.hbm [shape: f32[2,1024], index: 0, kind: input, shape index: {}]
  %s1 = inlined_call_operand.hbm [shape: f32[2,1024], index: 1, kind: output, shape index: {}]
  %s2 = sld [smem:[#allocation0]]
  $region18: #{tpu_custom_call.1} parent=0
    _
  %s4 = ssub.s32 1, %s2
  %s5 = scalar_select 0, %s4, %s2
  $region1: #{tpu_custom_call.1} parent=0
    #allocation2 [shape = 'u8[8192]{0}', space=vmem, size = 0x2000, scoped, tag = 'input window, operand 0, single buffered']
    #allocation3 [shape = 's32[1]{0}', space=sflag, size = 0x4, scoped, tag = 'scoped memory for tpu_custom_call.1']
    #allocation4 [shape = 's32[1]{0}', space=sflag, size = 0x4, scoped, tag = 'scoped memory for tpu_custom_call.1']
    #allocation5 [shape = 'u8[8192]{0}', space=vmem, size = 0x2000, scoped, tag = 'output window, operand 0, single buffered']
    %6 = vsyncpa [#allocation3], 0
    %7 = vsyncpa [#allocation4], 0
    // Predicated region
    $region2: #{tpu_custom_call.1} parent=1 // pred_check
      _
    $region3: #{tpu_custom_call.1} parent=1 // pred_check_branch
      %9 = sbr.rel (0) target = $region5
    $region4: #{tpu_custom_call.1} parent=1 // pred_region
      %s11 = ssub.s32 256, 256
      %12 = vsyncadd [#allocation3], %s11
      %s14 = sshll.u32 [#allocation2], 4
      %s15 = int_to_ptr.vmem [resolvable:$true] %s14
      %17 = dma.hbm_to_vmem [thread:$0]  %s0, 256, %s15, [#allocation3]
    $region5: #{tpu_custom_call.1} parent=1 // pred_fallthru
      _
    // Predicated region
    $region6: #{tpu_custom_call.1} parent=1 // pred_check
      _
    $region7: #{tpu_custom_call.1} parent=1 // pred_check_branch
      %19 = sbr.rel (0) target = $region9
    $region8: #{tpu_custom_call.1} parent=1 // pred_region
      %20 = dma.done [#allocation3], 256
    $region9: #{tpu_custom_call.1} parent=1 // pred_fallthru
      _
    %v21 = vld [vmem:[#allocation2] sm:$0xff]
    %v22 = vld [vmem:[#allocation2 + $0x8] sm:$0xff]
    %v23 = vmul.f32 %v21, 1.442695
    %v24 = vpow.pop %v23
    %v25 = vmul.f32 %v22, 1.442695
    %v26 = vpow.pop %v25
    %v27 = vadd.f32 %v24, 3.0
    %v28 = vadd.f32 %v26, 3.0
    %v29 = vmul.f32 %v27, %v24
    %v30 = vmul.f32 %v28, %v26
    %v31 = vadd.f32 %v29, 3.0
    %v32 = vadd.f32 %v30, 3.0
    %v33 = vmul.f32 %v24, %v31
    %v34 = vmul.f32 %v26, %v32
    %v35 = vadd.f32 %v33, 2.0
    %v36 = vadd.f32 %v34, 2.0
    %v37 = vrcp.pop %v35
    %v38 = vrcp.pop %v36
    %v39 = vmul.f32 %v33, %v37
    %v40 = vmul.f32 %v34, %v38
    %v41 = vmul.f32 %v21, %v39
    %v42 = vmul.f32 %v22, %v40
    %vm43 = vcmp.gt.f32.partialorder %v21, 26.666666
    %vm44 = vcmp.gt.f32.partialorder %v22, 26.666666
    %v45 = vsel %vm43, %v21, %v41
    %v46 = vsel %vm44, %v22, %v42
    %47 = vst [vmem:[#allocation5] sm:$0xff] %v45
    %48 = vst [vmem:[#allocation5 + $0x8] sm:$0xff] %v46
    // Predicated region
    $region10: #{tpu_custom_call.1} parent=1 // pred_check
      _
    $region11: #{tpu_custom_call.1} parent=1 // pred_check_branch
      %50 = sbr.rel (0) target = $region13
    $region12: #{tpu_custom_call.1} parent=1 // pred_region
      %s52 = ssub.s32 256, 256
      %53 = vsyncadd [#allocation4], %s52
      %s55 = sshll.u32 [#allocation5], 4
      %s56 = int_to_ptr.vmem [resolvable:$true] %s55
      %58 = dma.vmem_to_hbm [thread:$0]  %s56, 256, %s1, [#allocation4]
    $region13: #{tpu_custom_call.1} parent=1 // pred_fallthru
      _
    // Predicated region
    $region14: #{tpu_custom_call.1} parent=1 // pred_check
      _
    $region15: #{tpu_custom_call.1} parent=1 // pred_check_branch
      %60 = sbr.rel (0) target = $region17
    $region16: #{tpu_custom_call.1} parent=1 // pred_region
      %61 = dma.done [#allocation4], 256
    $region17: #{tpu_custom_call.1} parent=1 // pred_fallthru
      _
    %62 = vsyncpa [#allocation3], 1
    %63 = vsyncpa [#allocation4], 1

</llo_original>
